<compile_context>
chip_gen: v7x
topology: tpu7x:2x2x1
jax: 0.10.0
libtpu: 0.0.40
codegen_flags: <defaults>
</compile_context>

<pallas_src>
import jax
import jax.numpy as jnp
from jax.experimental import pallas as pl
from jax.experimental.pallas import tpu as pltpu


# ---------------------------------------------------------------------------
# Pallas kernel: single-invocation, lane-dense encoder forward.
# ---------------------------------------------------------------------------
def encoder_kernel(patches_ref, w1_ref, w2_ref, b2_ref, out_ref):
    # patches_ref: (Kp, N*P)    f32 -- im2col patches + ones row (b1) + zero pad
    # w1_ref:      (Cmid, Kp)   f32 -- stem conv weights, b1 folded in as a column
    # w2_ref:      (Cout, Cmid) f32 -- 1x1 pointwise conv weights (transposed)
    # b2_ref:      (Cout, 1)    f32
    # out_ref:     (Cout, N)    f32 -- per-image pooled features

    # Conv stem as matmul (bias already folded into the ones-row / bias-column).
    h1 = jnp.dot(w1_ref[...], patches_ref[...],
                 preferred_element_type=jnp.float32)          # (Cmid, N*P)
    h1 = h1 * jax.nn.sigmoid(h1)                              # SiLU, full lanes

    # Pointwise (1x1) conv as matmul + bias + SiLU.
    h2 = jnp.dot(w2_ref[...], h1,
                 preferred_element_type=jnp.float32)          # (Cout, N*P)
    h2 = h2 + b2_ref[...]
    h2 = h2 * jax.nn.sigmoid(h2)

    # classifier = AdaptiveAvgPool2d(1): per-image spatial mean.  Each image
    # owns a contiguous, 128-aligned lane slice of h2, so this is a plain XLU
    # lane reduction -- no pool matrix, no extra VMEM input.
    cout, n = out_ref.shape            # static Python ints
    npos = h2.shape[-1]
    p = npos // n
    inv_p = 1.0 / p
    for j in range(n):                                         # static unroll
        seg = h2[:, j * p:(j + 1) * p]                         # (Cout, P)
        out_ref[:, j:j + 1] = jnp.sum(seg, axis=-1, keepdims=True) * inv_p


# ---------------------------------------------------------------------------
# im2col emitting the lane-dense (K, N*P) layout directly (layout plumbing,
# not the hot path).
# ---------------------------------------------------------------------------
def im2col_3x3_s2_p1_t(x_nchw):
    """(N, C, H, W) -> (C*9, N*Ho*Wo) patches for a 3x3, stride-2, pad-1 conv."""
    n, c, h, w = x_nchw.shape
    k, stride, pad = 3, 2, 1
    ho = (h + 2 * pad - k) // stride + 1
    wo = (w + 2 * pad - k) // stride + 1
    xp = jnp.pad(x_nchw, ((0, 0), (0, 0), (pad, pad), (pad, pad)))
    taps = []
    for i in range(k):
        for j in range(k):
            taps.append(xp[:, :, i:i + stride * ho:stride, j:j + stride * wo:stride])
    # (9, N, C, Ho, Wo) -> (C, 9, N, Ho, Wo) -> (C*9, N*Ho*Wo)
    patches = jnp.stack(taps, axis=0).transpose(2, 0, 1, 3, 4)
    return patches.reshape(c * k * k, n * ho * wo)


# ---------------------------------------------------------------------------
# Wrapper: builds the augmented operands and calls pallas_call.
# ---------------------------------------------------------------------------
@jax.jit
def encoder_forward(img_nchw, w1, b1, w2, b2):
    n = img_nchw.shape[0]
    patches_t = im2col_3x3_s2_p1_t(img_nchw).astype(jnp.float32)  # (K1, N*P)
    k1, npos = patches_t.shape
    cmid = w1.shape[1]
    cout = w2.shape[1]

    # Fold b1 into the first matmul (ones-row in patches, bias column in w1)
    # and zero-pad K: 27 -> 32 for a clean sublane tile.  Padding is exact.
    kp = 32
    patches_aug = jnp.concatenate(
        [patches_t,
         jnp.ones((1, npos), jnp.float32),
         jnp.zeros((kp - k1 - 1, npos), jnp.float32)], axis=0)    # (Kp, N*P)
    w1_aug = jnp.concatenate(
        [w1.T.astype(jnp.float32),
         b1.reshape(cmid, 1).astype(jnp.float32),
         jnp.zeros((cmid, kp - k1 - 1), jnp.float32)], axis=1)    # (Cmid, Kp)
    w2_t = w2.T.astype(jnp.float32)                               # (Cout, Cmid)
    b2_col = b2.reshape(cout, 1).astype(jnp.float32)

    cost = pl.CostEstimate(
        flops=2 * npos * (kp * cmid + cmid * cout) + npos * cout,
        transcendentals=npos * (cmid + cout),
        bytes_accessed=4 * (patches_aug.size + w1_aug.size + w2_t.size
                            + b2_col.size + cout * n),
    )

    pooled = pl.pallas_call(
        encoder_kernel,
        out_shape=jax.ShapeDtypeStruct((cout, n), jnp.float32),
        grid=(1,),                                       # single grid step
        in_specs=[
            pl.BlockSpec((kp, npos), lambda i: (0, 0)),
            pl.BlockSpec((cmid, kp), lambda i: (0, 0)),
            pl.BlockSpec((cout, cmid), lambda i: (0, 0)),
            pl.BlockSpec((cout, 1), lambda i: (0, 0)),
        ],
        out_specs=pl.BlockSpec((cout, n), lambda i: (0, 0)),
        compiler_params=pltpu.CompilerParams(
            dimension_semantics=("arbitrary",)),
        cost_estimate=cost,
    )(patches_aug, w1_aug, w2_t, b2_col)

    # Head output -> (N, Cout); `x.squeeze()` drops all size-1 dims (so a
    # batch of 1 would also drop the batch dim, matching PyTorch).
    return jnp.squeeze(pooled.T)


# Pure-JAX reference (same f32 arithmetic) for a sanity check.
def encoder_reference(img_nchw, w1, b1, w2, b2):
    n = img_nchw.shape[0]
    patches_t = im2col_3x3_s2_p1_t(img_nchw).astype(jnp.float32)  # (K1, N*P)
    h1 = w1.T.astype(jnp.float32) @ patches_t + b1[:, None]
    h1 = h1 * jax.nn.sigmoid(h1)
    h2 = w2.T.astype(jnp.float32) @ h1 + b2[:, None]
    h2 = h2 * jax.nn.sigmoid(h2)
    p = patches_t.shape[1] // n
    h2 = h2.reshape(h2.shape[0], n, p)
    return jnp.mean(h2, axis=-1).T                                # (N, Cout)


if __name__ == "__main__":
    # Small shapes consistent with the module: NCHW RGB image input.
    N, CIN, H, W = 2, 3, 32, 32
    CMID, COUT = 32, 64
    K1 = CIN * 3 * 3  # 27

    key = jax.random.PRNGKey(0)
    k_img, k_w1, k_b1, k_w2, k_b2 = jax.random.split(key, 5)

    img = jax.random.normal(k_img, (N, CIN, H, W), dtype=jnp.float32)
    w1 = jax.random.normal(k_w1, (K1, CMID), dtype=jnp.float32) * 0.1
    b1 = jax.random.normal(k_b1, (CMID,), dtype=jnp.float32) * 0.01
    w2 = jax.random.normal(k_w2, (CMID, COUT), dtype=jnp.float32) * 0.1
    b2 = jax.random.normal(k_b2, (COUT,), dtype=jnp.float32) * 0.01

    out = jax.block_until_ready(encoder_forward(img, w1, b1, w2, b2))
    ref = jax.block_until_ready(encoder_reference(img, w1, b1, w2, b2))

    assert out.shape == (N, COUT), out.shape
    assert jnp.allclose(out, ref, atol=1e-3, rtol=1e-3), "mismatch vs reference"

    print("KERNEL_OK")
</pallas_src>

<mosaic_0001>
module attributes {stable_mosaic.version = 11 : i64} {
  func.func @encoder_kernel(%arg0: i32, %arg1: memref<32x512xf32, #tpu.memory_space<vmem>>, %arg2: memref<32x32xf32, #tpu.memory_space<vmem>>, %arg3: memref<64x32xf32, #tpu.memory_space<vmem>>, %arg4: memref<64x1xf32, #tpu.memory_space<vmem>>, %arg5: memref<64x2xf32, #tpu.memory_space<vmem>>) attributes {dimension_semantics = [#tpu.dimension_semantics<arbitrary>], iteration_bounds = array<i64: 1>, scalar_prefetch = 0 : i64, scratch_operands = 0 : i64, tpu.core_type = #tpu.core_type<tc>, window_params = [{pipeline_mode = #tpu.pipeline_mode<synchronous>, transform_indices = @transform_0, window_bounds = array<i64: 32, 512>}, {pipeline_mode = #tpu.pipeline_mode<synchronous>, transform_indices = @transform_1, window_bounds = array<i64: 32, 32>}, {pipeline_mode = #tpu.pipeline_mode<synchronous>, transform_indices = @transform_2, window_bounds = array<i64: 64, 32>}, {pipeline_mode = #tpu.pipeline_mode<synchronous>, transform_indices = @transform_3, window_bounds = array<i64: 64, 1>}, {pipeline_mode = #tpu.pipeline_mode<synchronous>, transform_indices = @transform_4, window_bounds = array<i64: 64, 2>}]} {
    %c0 = arith.constant 0 : index
    %c0_0 = arith.constant 0 : index
    %0 = vector.load %arg2[%c0, %c0_0] : memref<32x32xf32, #tpu.memory_space<vmem>>, vector<32x32xf32>
    %c0_1 = arith.constant 0 : index
    %c0_2 = arith.constant 0 : index
    %1 = vector.load %arg1[%c0_1, %c0_2] : memref<32x512xf32, #tpu.memory_space<vmem>>, vector<32x512xf32>
    %cst = arith.constant dense<0.000000e+00> : vector<32x512xf32>
    %2 = tpu.matmul %0, %1, %cst {dimension_numbers = #tpu.dot_dimension_numbers<[1], [0], [0], [1], [0, 0, 1, 1], [], []>} : vector<32x32xf32>, vector<32x512xf32>, vector<32x512xf32> -> vector<32x512xf32>
    %3 = arith.negf %2 : vector<32x512xf32>
    %4 = math.exp %3 : vector<32x512xf32>
    %cst_3 = arith.constant 1.000000e+00 : f32
    %5 = vector.broadcast %cst_3 : f32 to vector<32x512xf32>
    %6 = arith.addf %5, %4 : vector<32x512xf32>
    %7 = arith.divf %5, %6 : vector<32x512xf32>
    %8 = arith.mulf %2, %7 : vector<32x512xf32>
    %c0_4 = arith.constant 0 : index
    %c0_5 = arith.constant 0 : index
    %9 = vector.load %arg3[%c0_4, %c0_5] : memref<64x32xf32, #tpu.memory_space<vmem>>, vector<64x32xf32>
    %cst_6 = arith.constant dense<0.000000e+00> : vector<64x512xf32>
    %10 = tpu.matmul %9, %8, %cst_6 {dimension_numbers = #tpu.dot_dimension_numbers<[1], [0], [0], [1], [0, 0, 1, 1], [], []>} : vector<64x32xf32>, vector<32x512xf32>, vector<64x512xf32> -> vector<64x512xf32>
    %c0_7 = arith.constant 0 : index
    %c0_8 = arith.constant 0 : index
    %11 = vector.load %arg4[%c0_7, %c0_8] : memref<64x1xf32, #tpu.memory_space<vmem>>, vector<64x1xf32>
    %12 = vector.broadcast %11 : vector<64x1xf32> to vector<64x512xf32>
    %13 = arith.addf %10, %12 : vector<64x512xf32>
    %14 = arith.negf %13 : vector<64x512xf32>
    %15 = math.exp %14 : vector<64x512xf32>
    %cst_9 = arith.constant 1.000000e+00 : f32
    %16 = vector.broadcast %cst_9 : f32 to vector<64x512xf32>
    %17 = arith.addf %16, %15 : vector<64x512xf32>
    %18 = arith.divf %16, %17 : vector<64x512xf32>
    %19 = arith.mulf %13, %18 : vector<64x512xf32>
    %20 = vector.extract_strided_slice %19 {offsets = [0, 0], sizes = [64, 256], strides = [1, 1]} : vector<64x512xf32> to vector<64x256xf32>
    %cst_10 = arith.constant dense<0.000000e+00> : vector<64xf32>
    %21 = vector.multi_reduction <add>, %20, %cst_10 [1] : vector<64x256xf32> to vector<64xf32>
    %22 = vector.shape_cast %21 : vector<64xf32> to vector<64x1xf32>
    %cst_11 = arith.constant 3.906250e-03 : f32
    %23 = vector.broadcast %cst_11 : f32 to vector<64x1xf32>
    %24 = arith.mulf %22, %23 : vector<64x1xf32>
    %c0_12 = arith.constant 0 : index
    %c0_13 = arith.constant 0 : index
    %25 = vector.load %arg5[%c0_12, %c0_13] : memref<64x2xf32, #tpu.memory_space<vmem>>, vector<64x1xf32>
    tpu.vector_store %arg5[%c0_12, %c0_13], %24 {strides = array<i32>} : memref<64x2xf32, #tpu.memory_space<vmem>>, vector<64x1xf32>,
    %26 = vector.extract_strided_slice %19 {offsets = [0, 256], sizes = [64, 256], strides = [1, 1]} : vector<64x512xf32> to vector<64x256xf32>
    %cst_14 = arith.constant dense<0.000000e+00> : vector<64xf32>
    %27 = vector.multi_reduction <add>, %26, %cst_14 [1] : vector<64x256xf32> to vector<64xf32>
    %28 = vector.shape_cast %27 : vector<64xf32> to vector<64x1xf32>
    %cst_15 = arith.constant 3.906250e-03 : f32
    %29 = vector.broadcast %cst_15 : f32 to vector<64x1xf32>
    %30 = arith.mulf %28, %29 : vector<64x1xf32>
    %c0_16 = arith.constant 0 : index
    %c1 = arith.constant 1 : index
    %31 = vector.load %arg5[%c0_16, %c1] : memref<64x2xf32, #tpu.memory_space<vmem>>, vector<64x1xf32>
    tpu.vector_store %arg5[%c0_16, %c1], %30 {strides = array<i32>} : memref<64x2xf32, #tpu.memory_space<vmem>>, vector<64x1xf32>,
    return
  }
  func.func @transform_0(%arg0: i32) -> (i32, i32) {
    %c0_i32 = arith.constant 0 : i32
    %c0_i32_0 = arith.constant 0 : i32
    %c0_i32_1 = arith.constant 0 : i32
    return %c0_i32, %c0_i32_0 : i32, i32
  }
  func.func @transform_1(%arg0: i32) -> (i32, i32) {
    %c0_i32 = arith.constant 0 : i32
    %c0_i32_0 = arith.constant 0 : i32
    %c0_i32_1 = arith.constant 0 : i32
    return %c0_i32, %c0_i32_0 : i32, i32
  }
  func.func @transform_2(%arg0: i32) -> (i32, i32) {
    %c0_i32 = arith.constant 0 : i32
    %c0_i32_0 = arith.constant 0 : i32
    %c0_i32_1 = arith.constant 0 : i32
    return %c0_i32, %c0_i32_0 : i32, i32
  }
  func.func @transform_3(%arg0: i32) -> (i32, i32) {
    %c0_i32 = arith.constant 0 : i32
    %c0_i32_0 = arith.constant 0 : i32
    %c0_i32_1 = arith.constant 0 : i32
    return %c0_i32, %c0_i32_0 : i32, i32
  }
  func.func @transform_4(%arg0: i32) -> (i32, i32) {
    %c0_i32 = arith.constant 0 : i32
    %c0_i32_0 = arith.constant 0 : i32
    %c0_i32_1 = arith.constant 0 : i32
    return %c0_i32, %c0_i32_0 : i32, i32
  }
}

</mosaic_0001>

<llo_original>
// kernel: encoder_forward.1
$region0: #{encoder_forward.1}
  #allocation0 [shape = 'u32[]', space=smem, size = 0x4, offset = 0x4, fixed_abs, tag = 'smem constant byte address 0x4 - core index']
  #allocation1 [shape = 'u32[144,128]{1,0:T(1,128)}', space=vmem, size = 0x12000, scoped, tag = 'internal scratch']
  %s0 = inlined_call_operand.vmem [shape: f32[32,512], index: 0, kind: input, shape index: {}]
  %s1 = inlined_call_operand.vmem [shape: f32[32,32], index: 1, kind: input, shape index: {}]
  %s2 = inlined_call_operand.vmem [shape: f32[64,32], index: 2, kind: input, shape index: {}]
  %s3 = inlined_call_operand.vmem [shape: f32[64,1], index: 3, kind: input, shape index: {}]
  %s4 = inlined_call_operand.vmem [shape: f32[64,2], index: 4, kind: output, shape index: {}]
  %s5 = sld [smem:[#allocation0]]
  $region26: #{encoder_forward.1} parent=0
    _
  %s7 = ssub.s32 1, %s5
  %s8 = scalar_select 0, %s7, %s5
  // Predicated region
  $region2: #{encoder_forward.1} parent=0 // pred_check
    _
  $region3: #{encoder_forward.1} parent=0 // pred_check_branch
    %10 = sbr.rel (0) target = $region5
  $region4: #{encoder_forward.1} parent=0 // pred_region
    _
  $region5: #{encoder_forward.1} parent=0 // pred_fallthru
    _
  // Predicated region
  $region6: #{encoder_forward.1} parent=0 // pred_check
    _
  $region7: #{encoder_forward.1} parent=0 // pred_check_branch
    %12 = sbr.rel (0) target = $region9
  $region8: #{encoder_forward.1} parent=0 // pred_region
    _
  $region9: #{encoder_forward.1} parent=0 // pred_fallthru
    _
  // Predicated region
  $region10: #{encoder_forward.1} parent=0 // pred_check
    _
  $region11: #{encoder_forward.1} parent=0 // pred_check_branch
    %14 = sbr.rel (0) target = $region13
  $region12: #{encoder_forward.1} parent=0 // pred_region
    _
  $region13: #{encoder_forward.1} parent=0 // pred_fallthru
    _
  // Predicated region
  $region14: #{encoder_forward.1} parent=0 // pred_check
    _
  $region15: #{encoder_forward.1} parent=0 // pred_check_branch
    %16 = sbr.rel (0) target = $region17
  $region16: #{encoder_forward.1} parent=0 // pred_region
    _
  $region17: #{encoder_forward.1} parent=0 // pred_fallthru
    _
  %v17 = vld [vmem:[%s1] sm:$0xff]
  %v18 = vld [vmem:[%s1 + $0x8] sm:$0xff]
  %v19 = vld [vmem:[%s1 + $0x10] sm:$0xff]
  %v20 = vld [vmem:[%s1 + $0x18] sm:$0xff]
  %v21 = vld [vmem:[%s0] sm:$0xff]
  %v22 = vld [vmem:[%s0 + $0x8] sm:$0xff]
  %v23 = vld [vmem:[%s0 + $0x10] sm:$0xff]
  %v24 = vld [vmem:[%s0 + $0x18] sm:$0xff]
  %v25 = vld [vmem:[%s0 + $0x20] sm:$0xff]
  %v26 = vld [vmem:[%s0 + $0x28] sm:$0xff]
  %v27 = vld [vmem:[%s0 + $0x30] sm:$0xff]
  %v28 = vld [vmem:[%s0 + $0x38] sm:$0xff]
  %v29 = vld [vmem:[%s0 + $0x40] sm:$0xff]
  %v30 = vld [vmem:[%s0 + $0x48] sm:$0xff]
  %v31 = vld [vmem:[%s0 + $0x50] sm:$0xff]
  %v32 = vld [vmem:[%s0 + $0x58] sm:$0xff]
  %v33 = vld [vmem:[%s0 + $0x60] sm:$0xff]
  %v34 = vld [vmem:[%s0 + $0x68] sm:$0xff]
  %v35 = vld [vmem:[%s0 + $0x70] sm:$0xff]
  %v36 = vld [vmem:[%s0 + $0x78] sm:$0xff]
  %vm37 = vcmask 261120
  %v39 = vsel %vm37, %v17, 0
  %v42 = vsel %vm37, %v18, 0
  %v45 = vsel %vm37, %v19, 0
  %v48 = vsel %vm37, %v20, 0
  %50 = vmatprep.subr.mxu0 %v22
  %51 = vmatpush1.msra.mxu0 %v21
  %52 = vmatprep.subr.mxu0 %v26
  %53 = vmatpush1.msra.mxu0 %v25
  %54 = vmatprep.subr.mxu0 %v30
  %55 = vmatpush1.msra.mxu0 %v29
  %56 = vmatprep.subr.mxu0 %v34
  %57 = vmatpush1.msra.mxu0 %v33
  %58 = vmatprep.subr.mxu0 0.0
  %59 = vmatpush1.msra.mxu0 0.0
  %60 = vmatprep.subr.mxu0 0.0
  %61 = vmatpush1.msra.mxu0 0.0
  %62 = vmatprep.subr.mxu0 0.0
  %63 = vmatpush1.msra.mxu0 0.0
  %64 = vmatprep.subr.mxu0 0.0
  %65 = vmatpush1.msra.mxu0 0.0
  %66 = vmatprep.subr.mxu0 0.0
  %67 = vmatpush1.msra.mxu0 0.0
  %68 = vmatprep.subr.mxu0 0.0
  %69 = vmatpush1.msra.mxu0 0.0
  %70 = vmatprep.subr.mxu0 0.0
  %71 = vmatpush1.msra.mxu0 0.0
  %72 = vmatprep.subr.mxu0 0.0
  %73 = vmatpush1.msra.mxu0 0.0
  %74 = vmatprep.subr.mxu0 0.0
  %75 = vmatpush1.msra.mxu0 0.0
  %76 = vmatprep.subr.mxu0 0.0
  %77 = vmatpush1.msra.mxu0 0.0
  %78 = vmatprep.subr.mxu0 0.0
  %79 = vmatpush1.msra.mxu0 0.0
  %80 = vmatprep.subr.mxu0 0.0
  %81 = vmatpush1.msra.mxu0 0.0
  %82 = vmatprep.subr.mxu0 0.0
  %83 = vmatpush1.msra.mxu0 0.0
  %84 = vmatprep.subr.mxu0 0.0
  %85 = vmatpush1.msra.mxu0 0.0
  %86 = vmatprep.subr.mxu0 0.0
  %87 = vmatpush1.msra.mxu0 0.0
  %88 = vmatprep.subr.mxu0 0.0
  %89 = vmatpush1.msra.mxu0 0.0
  %90 = vmatprep.subr.mxu0 0.0
  %91 = vmatpush1.msra.mxu0 0.0
  %92 = vmatprep.subr.mxu0 0.0
  %93 = vmatpush1.msra.mxu0 0.0
  %94 = vmatprep.subr.mxu0 0.0
  %95 = vmatpush1.msra.mxu0 0.0
  %96 = vmatprep.subr.mxu0 0.0
  %97 = vmatpush1.msra.mxu0 0.0
  %98 = vmatprep.subr.mxu0 0.0
  %99 = vmatpush1.msra.mxu0 0.0
  %100 = vmatprep.subr.mxu0 0.0
  %101 = vmatpush1.msra.mxu0 0.0
  %102 = vmatprep.subr.mxu0 0.0
  %103 = vmatpush1.msra.mxu0 0.0
  %104 = vmatprep.subr.mxu0 0.0
  %105 = vmatpush1.msra.mxu0 0.0
  %106 = vmatprep.subr.mxu0 0.0
  %107 = vmatpush1.msra.mxu0 0.0
  %108 = vmatprep.subr.mxu0 0.0
  %109 = vmatpush1.msra.mxu0 0.0
  %110 = vmatprep.subr.mxu0 0.0
  %111 = vmatpush1.msra.mxu0 0.0
  %112 = vmatprep.subr.mxu0 0.0
  %113 = vmatpush1.msra.mxu0 0.0
  %114 = vmatprep.mubr.f32.mxu0 0.0
  %115 = vmatmul.mubr.f32.gmra.mrb[0].mxu0 %v39
  %v116 = vpop.f32.mrb[0].mxu0
  %v117 = vadd.f32 0.0, %v116
  %v118 = vpop.f32.mrb[0].mxu0
  %v119 = vadd.f32 0.0, %v118
  %120 = vmatprep.mubr.f32.mxu0 0.0
  %121 = vmatmul.mubr.f32.gmra.mrb[0].mxu0 %v42
  %v122 = vpop.f32.mrb[0].mxu0
  %v123 = vadd.f32 0.0, %v122
  %v124 = vpop.f32.mrb[0].mxu0
  %v125 = vadd.f32 0.0, %v124
  %126 = vmatprep.mubr.f32.mxu0 0.0
  %127 = vmatmul.mubr.f32.gmra.mrb[0].mxu0 %v45
  %v128 = vpop.f32.mrb[0].mxu0
  %v129 = vadd.f32 0.0, %v128
  %v130 = vpop.f32.mrb[0].mxu0
  %v131 = vadd.f32 0.0, %v130
  %132 = vmatprep.mubr.f32.mxu0 0.0
  %133 = vmatmul.mubr.f32.gmra.mrb[0].mxu0 %v48
  %v134 = vpop.f32.mrb[0].mxu0
  %v135 = vadd.f32 0.0, %v134
  %v136 = vpop.f32.mrb[0].mxu0
  %v137 = vadd.f32 0.0, %v136
  %138 = vdwg.mxu0
  %139 = vmatprep.subr.mxu0 %v24
  %140 = vmatpush1.msra.mxu0 %v23
  %141 = vmatprep.subr.mxu0 %v28
  %142 = vmatpush1.msra.mxu0 %v27
  %143 = vmatprep.subr.mxu0 %v32
  %144 = vmatpush1.msra.mxu0 %v31
  %145 = vmatprep.subr.mxu0 %v36
  %146 = vmatpush1.msra.mxu0 %v35
  %147 = vmatprep.subr.mxu0 0.0
  %148 = vmatpush1.msra.mxu0 0.0
  %149 = vmatprep.subr.mxu0 0.0
  %150 = vmatpush1.msra.mxu0 0.0
  %151 = vmatprep.subr.mxu0 0.0
  %152 = vmatpush1.msra.mxu0 0.0
  %153 = vmatprep.subr.mxu0 0.0
  %154 = vmatpush1.msra.mxu0 0.0
  %155 = vmatprep.subr.mxu0 0.0
  %156 = vmatpush1.msra.mxu0 0.0
  %157 = vmatprep.subr.mxu0 0.0
  %158 = vmatpush1.msra.mxu0 0.0
  %159 = vmatprep.subr.mxu0 0.0
  %160 = vmatpush1.msra.mxu0 0.0
  %161 = vmatprep.subr.mxu0 0.0
  %162 = vmatpush1.msra.mxu0 0.0
  %163 = vmatprep.subr.mxu0 0.0
  %164 = vmatpush1.msra.mxu0 0.0
  %165 = vmatprep.subr.mxu0 0.0
  %166 = vmatpush1.msra.mxu0 0.0
  %167 = vmatprep.subr.mxu0 0.0
  %168 = vmatpush1.msra.mxu0 0.0
  %169 = vmatprep.subr.mxu0 0.0
  %170 = vmatpush1.msra.mxu0 0.0
  %171 = vmatprep.subr.mxu0 0.0
  %172 = vmatpush1.msra.mxu0 0.0
  %173 = vmatprep.subr.mxu0 0.0
  %174 = vmatpush1.msra.mxu0 0.0
  %175 = vmatprep.subr.mxu0 0.0
  %176 = vmatpush1.msra.mxu0 0.0
  %177 = vmatprep.subr.mxu0 0.0
  %178 = vmatpush1.msra.mxu0 0.0
  %179 = vmatprep.subr.mxu0 0.0
  %180 = vmatpush1.msra.mxu0 0.0
  %181 = vmatprep.subr.mxu0 0.0
  %182 = vmatpush1.msra.mxu0 0.0
  %183 = vmatprep.subr.mxu0 0.0
  %184 = vmatpush1.msra.mxu0 0.0
  %185 = vmatprep.subr.mxu0 0.0
  %186 = vmatpush1.msra.mxu0 0.0
  %187 = vmatprep.subr.mxu0 0.0
  %188 = vmatpush1.msra.mxu0 0.0
  %189 = vmatprep.subr.mxu0 0.0
  %190 = vmatpush1.msra.mxu0 0.0
  %191 = vmatprep.subr.mxu0 0.0
  %192 = vmatpush1.msra.mxu0 0.0
  %193 = vmatprep.subr.mxu0 0.0
  %194 = vmatpush1.msra.mxu0 0.0
  %195 = vmatprep.subr.mxu0 0.0
  %196 = vmatpush1.msra.mxu0 0.0
  %197 = vmatprep.subr.mxu0 0.0
  %198 = vmatpush1.msra.mxu0 0.0
  %199 = vmatprep.subr.mxu0 0.0
  %200 = vmatpush1.msra.mxu0 0.0
  %201 = vmatprep.subr.mxu0 0.0
  %202 = vmatpush1.msra.mxu0 0.0
  %203 = vmatprep.mubr.f32.mxu0 0.0
  %204 = vmatmul.mubr.f32.gmra.mrb[0].mxu0 %v39
  %v205 = vpop.f32.mrb[0].mxu0
  %v206 = vadd.f32 0.0, %v205
  %v207 = vpop.f32.mrb[0].mxu0
  %v208 = vadd.f32 0.0, %v207
  %209 = vmatprep.mubr.f32.mxu0 0.0
  %210 = vmatmul.mubr.f32.gmra.mrb[0].mxu0 %v42
  %v211 = vpop.f32.mrb[0].mxu0
  %v212 = vadd.f32 0.0, %v211
  %v213 = vpop.f32.mrb[0].mxu0
  %v214 = vadd.f32 0.0, %v213
  %215 = vmatprep.mubr.f32.mxu0 0.0
  %216 = vmatmul.mubr.f32.gmra.mrb[0].mxu0 %v45
  %v217 = vpop.f32.mrb[0].mxu0
  %v218 = vadd.f32 0.0, %v217
  %v219 = vpop.f32.mrb[0].mxu0
  %v220 = vadd.f32 0.0, %v219
  %221 = vmatprep.mubr.f32.mxu0 0.0
  %222 = vmatmul.mubr.f32.gmra.mrb[0].mxu0 %v48
  %v223 = vpop.f32.mrb[0].mxu0
  %v224 = vadd.f32 0.0, %v223
  %v225 = vpop.f32.mrb[0].mxu0
  %v226 = vadd.f32 0.0, %v225
  %227 = vdwg.mxu0
  %v228 = vxor.u32 %v117, 2147483648
  %v229 = vxor.u32 %v119, 2147483648
  %v230 = vxor.u32 %v206, 2147483648
  %v231 = vxor.u32 %v208, 2147483648
  %v232 = vxor.u32 %v123, 2147483648
  %v233 = vxor.u32 %v125, 2147483648
  %v234 = vxor.u32 %v212, 2147483648
  %v235 = vxor.u32 %v214, 2147483648
  %v236 = vxor.u32 %v129, 2147483648
  %v237 = vxor.u32 %v131, 2147483648
  %v238 = vxor.u32 %v218, 2147483648
  %v239 = vxor.u32 %v220, 2147483648
  %v240 = vxor.u32 %v135, 2147483648
  %v241 = vxor.u32 %v137, 2147483648
  %v242 = vxor.u32 %v224, 2147483648
  %v243 = vxor.u32 %v226, 2147483648
  %v244 = vmul.f32 %v228, 1.442695
  %v245 = vpow.pop %v244
  %v246 = vmul.f32 %v229, 1.442695
  %v247 = vpow.pop %v246
  %v248 = vmul.f32 %v230, 1.442695
  %v249 = vpow.pop %v248
  %v250 = vmul.f32 %v231, 1.442695
  %v251 = vpow.pop %v250
  %v252 = vmul.f32 %v232, 1.442695
  %v253 = vpow.pop %v252
  %v254 = vmul.f32 %v233, 1.442695
  %v255 = vpow.pop %v254
  %v256 = vmul.f32 %v234, 1.442695
  %v257 = vpow.pop %v256
  %v258 = vmul.f32 %v235, 1.442695
  %v259 = vpow.pop %v258
  %v260 = vmul.f32 %v236, 1.442695
  %v261 = vpow.pop %v260
  %v262 = vmul.f32 %v237, 1.442695
  %v263 = vpow.pop %v262
  %v264 = vmul.f32 %v238, 1.442695
  %v265 = vpow.pop %v264
  %v266 = vmul.f32 %v239, 1.442695
  %v267 = vpow.pop %v266
  %v268 = vmul.f32 %v240, 1.442695
  %v269 = vpow.pop %v268
  %v270 = vmul.f32 %v241, 1.442695
  %v271 = vpow.pop %v270
  %v272 = vmul.f32 %v242, 1.442695
  %v273 = vpow.pop %v272
  %v274 = vmul.f32 %v243, 1.442695
  %v275 = vpow.pop %v274
  %v276 = vadd.f32 %v245, 1.0
  %v277 = vadd.f32 %v247, 1.0
  %v278 = vadd.f32 %v249, 1.0
  %v279 = vadd.f32 %v251, 1.0
  %v280 = vadd.f32 %v253, 1.0
  %v281 = vadd.f32 %v255, 1.0
  %v282 = vadd.f32 %v257, 1.0
  %v283 = vadd.f32 %v259, 1.0
  %v284 = vadd.f32 %v261, 1.0
  %v285 = vadd.f32 %v263, 1.0
  %v286 = vadd.f32 %v265, 1.0
  %v287 = vadd.f32 %v267, 1.0
  %v288 = vadd.f32 %v269, 1.0
  %v289 = vadd.f32 %v271, 1.0
  %v290 = vadd.f32 %v273, 1.0
  %v291 = vadd.f32 %v275, 1.0
  %v292 = vrcp.pop %v276
  %v293 = vmul.f32 1.0, %v292
  %v294 = vrcp.pop %v277
  %v295 = vmul.f32 1.0, %v294
  %v296 = vrcp.pop %v278
  %v297 = vmul.f32 1.0, %v296
  %v298 = vrcp.pop %v279
  %v299 = vmul.f32 1.0, %v298
  %v300 = vrcp.pop %v280
  %v301 = vmul.f32 1.0, %v300
  %v302 = vrcp.pop %v281
  %v303 = vmul.f32 1.0, %v302
  %v304 = vrcp.pop %v282
  %v305 = vmul.f32 1.0, %v304
  %v306 = vrcp.pop %v283
  %v307 = vmul.f32 1.0, %v306
  %v308 = vrcp.pop %v284
  %v309 = vmul.f32 1.0, %v308
  %v310 = vrcp.pop %v285
  %v311 = vmul.f32 1.0, %v310
  %v312 = vrcp.pop %v286
  %v313 = vmul.f32 1.0, %v312
  %v314 = vrcp.pop %v287
  %v315 = vmul.f32 1.0, %v314
  %v316 = vrcp.pop %v288
  %v317 = vmul.f32 1.0, %v316
  %v318 = vrcp.pop %v289
  %v319 = vmul.f32 1.0, %v318
  %v320 = vrcp.pop %v290
  %v321 = vmul.f32 1.0, %v320
  %v322 = vrcp.pop %v291
  %v323 = vmul.f32 1.0, %v322
  %v324 = vmul.f32 %v117, %v293
  %v325 = vmul.f32 %v119, %v295
  %v326 = vmul.f32 %v206, %v297
  %v327 = vmul.f32 %v208, %v299
  %v328 = vmul.f32 %v123, %v301
  %v329 = vmul.f32 %v125, %v303
  %v330 = vmul.f32 %v212, %v305
  %v331 = vmul.f32 %v214, %v307
  %v332 = vmul.f32 %v129, %v309
  %v333 = vmul.f32 %v131, %v311
  %v334 = vmul.f32 %v218, %v313
  %v335 = vmul.f32 %v220, %v315
  %v336 = vmul.f32 %v135, %v317
  %v337 = vmul.f32 %v137, %v319
  %v338 = vmul.f32 %v224, %v321
  %v339 = vmul.f32 %v226, %v323
  %v340 = vld [vmem:[%s2] sm:$0xff]
  %v341 = vld [vmem:[%s2 + $0x8] sm:$0xff]
  %v342 = vld [vmem:[%s2 + $0x10] sm:$0xff]
  %v343 = vld [vmem:[%s2 + $0x18] sm:$0xff]
  %v344 = vld [vmem:[%s2 + $0x20] sm:$0xff]
  %v345 = vld [vmem:[%s2 + $0x28] sm:$0xff]
  %v346 = vld [vmem:[%s2 + $0x30] sm:$0xff]
  %v347 = vld [vmem:[%s2 + $0x38] sm:$0xff]
  %v348 = vld [vmem:[%s3] sm:$0xff]
  %v349 = vld [vmem:[%s3 + $0x8] sm:$0xff]
  %v350 = vld [vmem:[%s3 + $0x10] sm:$0xff]
  %v351 = vld [vmem:[%s3 + $0x18] sm:$0xff]
  %v352 = vld [vmem:[%s3 + $0x20] sm:$0xff]
  %v353 = vld [vmem:[%s3 + $0x28] sm:$0xff]
  %v354 = vld [vmem:[%s3 + $0x30] sm:$0xff]
  %v355 = vld [vmem:[%s3 + $0x38] sm:$0xff]
  %357 = vset.pattern.permute.xlu0 0
  %358 = vperm.xlu0 %357, %v348
  %v359 = vpop.permute.xlu0 %358
  %362 = vset.pattern.permute.xlu0 0
  %363 = vperm.xlu0 %362, %v349
  %v364 = vpop.permute.xlu0 %363
  %367 = vset.pattern.permute.xlu0 0
  %368 = vperm.xlu0 %367, %v350
  %v369 = vpop.permute.xlu0 %368
  %372 = vset.pattern.permute.xlu0 0
  %373 = vperm.xlu0 %372, %v351
  %v374 = vpop.permute.xlu0 %373
  %377 = vset.pattern.permute.xlu0 0
  %378 = vperm.xlu0 %377, %v352
  %v379 = vpop.permute.xlu0 %378
  %382 = vset.pattern.permute.xlu0 0
  %383 = vperm.xlu0 %382, %v353
  %v384 = vpop.permute.xlu0 %383
  %387 = vset.pattern.permute.xlu0 0
  %388 = vperm.xlu0 %387, %v354
  %v389 = vpop.permute.xlu0 %388
  %392 = vset.pattern.permute.xlu0 0
  %393 = vperm.xlu0 %392, %v355
  %v394 = vpop.permute.xlu0 %393
  %v397 = vsel %vm37, %v340, 0
  %v400 = vsel %vm37, %v341, 0
  %v403 = vsel %vm37, %v342, 0
  %v406 = vsel %vm37, %v343, 0
  %v409 = vsel %vm37, %v344, 0
  %v412 = vsel %vm37, %v345, 0
  %v415 = vsel %vm37, %v346, 0
  %v418 = vsel %vm37, %v347, 0
  %420 = vmatprep.subr.mxu0 %v325
  %421 = vmatpush1.msra.mxu0 %v324
  %422 = vmatprep.subr.mxu0 %v329
  %423 = vmatpush1.msra.mxu0 %v328
  %424 = vmatprep.subr.mxu0 %v333
  %425 = vmatpush1.msra.mxu0 %v332
  %426 = vmatprep.subr.mxu0 %v337
  %427 = vmatpush1.msra.mxu0 %v336
  %428 = vmatprep.subr.mxu0 0.0
  %429 = vmatpush1.msra.mxu0 0.0
  %430 = vmatprep.subr.mxu0 0.0
  %431 = vmatpush1.msra.mxu0 0.0
  %432 = vmatprep.subr.mxu0 0.0
  %433 = vmatpush1.msra.mxu0 0.0
  %434 = vmatprep.subr.mxu0 0.0
  %435 = vmatpush1.msra.mxu0 0.0
  %436 = vmatprep.subr.mxu0 0.0
  %437 = vmatpush1.msra.mxu0 0.0
  %438 = vmatprep.subr.mxu0 0.0
  %439 = vmatpush1.msra.mxu0 0.0
  %440 = vmatprep.subr.mxu0 0.0
  %441 = vmatpush1.msra.mxu0 0.0
  %442 = vmatprep.subr.mxu0 0.0
  %443 = vmatpush1.msra.mxu0 0.0
  %444 = vmatprep.subr.mxu0 0.0
  %445 = vmatpush1.msra.mxu0 0.0
  %446 = vmatprep.subr.mxu0 0.0
  %447 = vmatpush1.msra.mxu0 0.0
  %448 = vmatprep.subr.mxu0 0.0
  %449 = vmatpush1.msra.mxu0 0.0
  %450 = vmatprep.subr.mxu0 0.0
  %451 = vmatpush1.msra.mxu0 0.0
  %452 = vmatprep.subr.mxu0 0.0
  %453 = vmatpush1.msra.mxu0 0.0
  %454 = vmatprep.subr.mxu0 0.0
  %455 = vmatpush1.msra.mxu0 0.0
  %456 = vmatprep.subr.mxu0 0.0
  %457 = vmatpush1.msra.mxu0 0.0
  %458 = vmatprep.subr.mxu0 0.0
  %459 = vmatpush1.msra.mxu0 0.0
  %460 = vmatprep.subr.mxu0 0.0
  %461 = vmatpush1.msra.mxu0 0.0
  %462 = vmatprep.subr.mxu0 0.0
  %463 = vmatpush1.msra.mxu0 0.0
  %464 = vmatprep.subr.mxu0 0.0
  %465 = vmatpush1.msra.mxu0 0.0
  %466 = vmatprep.subr.mxu0 0.0
  %467 = vmatpush1.msra.mxu0 0.0
  %468 = vmatprep.subr.mxu0 0.0
  %469 = vmatpush1.msra.mxu0 0.0
  %470 = vmatprep.subr.mxu0 0.0
  %471 = vmatpush1.msra.mxu0 0.0
  %472 = vmatprep.subr.mxu0 0.0
  %473 = vmatpush1.msra.mxu0 0.0
  %474 = vmatprep.subr.mxu0 0.0
  %475 = vmatpush1.msra.mxu0 0.0
  %476 = vmatprep.subr.mxu0 0.0
  %477 = vmatpush1.msra.mxu0 0.0
  %478 = vmatprep.subr.mxu0 0.0
  %479 = vmatpush1.msra.mxu0 0.0
  %480 = vmatprep.subr.mxu0 0.0
  %481 = vmatpush1.msra.mxu0 0.0
  %482 = vmatprep.subr.mxu0 0.0
  %483 = vmatpush1.msra.mxu0 0.0
  %484 = vmatprep.mubr.f32.mxu0 0.0
  %485 = vmatmul.mubr.f32.gmra.mrb[0].mxu0 %v397
  %v486 = vpop.f32.mrb[0].mxu0
  %v487 = vadd.f32 %v359, %v486
  %v488 = vpop.f32.mrb[0].mxu0
  %v489 = vadd.f32 %v359, %v488
  %490 = vmatprep.mubr.f32.mxu0 0.0
  %491 = vmatmul.mubr.f32.gmra.mrb[0].mxu0 %v400
  %v492 = vpop.f32.mrb[0].mxu0
  %v493 = vadd.f32 %v364, %v492
  %v494 = vpop.f32.mrb[0].mxu0
  %v495 = vadd.f32 %v364, %v494
  %496 = vmatprep.mubr.f32.mxu0 0.0
  %497 = vmatmul.mubr.f32.gmra.mrb[0].mxu0 %v403
  %v498 = vpop.f32.mrb[0].mxu0
  %v499 = vadd.f32 %v369, %v498
  %v500 = vpop.f32.mrb[0].mxu0
  %v501 = vadd.f32 %v369, %v500
  %502 = vmatprep.mubr.f32.mxu0 0.0
  %503 = vmatmul.mubr.f32.gmra.mrb[0].mxu0 %v406
  %v504 = vpop.f32.mrb[0].mxu0
  %v505 = vadd.f32 %v374, %v504
  %v506 = vpop.f32.mrb[0].mxu0
  %v507 = vadd.f32 %v374, %v506
  %508 = vmatprep.mubr.f32.mxu0 0.0
  %509 = vmatmul.mubr.f32.gmra.mrb[0].mxu0 %v409
  %v510 = vpop.f32.mrb[0].mxu0
  %v511 = vadd.f32 %v379, %v510
  %v512 = vpop.f32.mrb[0].mxu0
  %v513 = vadd.f32 %v379, %v512
  %514 = vmatprep.mubr.f32.mxu0 0.0
  %515 = vmatmul.mubr.f32.gmra.mrb[0].mxu0 %v412
  %v516 = vpop.f32.mrb[0].mxu0
  %v517 = vadd.f32 %v384, %v516
  %v518 = vpop.f32.mrb[0].mxu0
  %v519 = vadd.f32 %v384, %v518
  %520 = vmatprep.mubr.f32.mxu0 0.0
  %521 = vmatmul.mubr.f32.gmra.mrb[0].mxu0 %v415
  %v522 = vpop.f32.mrb[0].mxu0
  %v523 = vadd.f32 %v389, %v522
  %v524 = vpop.f32.mrb[0].mxu0
  %v525 = vadd.f32 %v389, %v524
  %526 = vmatprep.mubr.f32.mxu0 0.0
  %527 = vmatmul.mubr.f32.gmra.mrb[0].mxu0 %v418
  %v528 = vpop.f32.mrb[0].mxu0
  %v529 = vadd.f32 %v394, %v528
  %v530 = vpop.f32.mrb[0].mxu0
  %v531 = vadd.f32 %v394, %v530
  %532 = vdwg.mxu0
  %533 = vmatprep.subr.mxu0 %v327
  %534 = vmatpush1.msra.mxu0 %v326
  %535 = vmatprep.subr.mxu0 %v331
  %536 = vmatpush1.msra.mxu0 %v330
  %537 = vmatprep.subr.mxu0 %v335
  %538 = vmatpush1.msra.mxu0 %v334
  %539 = vmatprep.subr.mxu0 %v339
  %540 = vmatpush1.msra.mxu0 %v338
  %541 = vmatprep.subr.mxu0 0.0
  %542 = vmatpush1.msra.mxu0 0.0
  %543 = vmatprep.subr.mxu0 0.0
  %544 = vmatpush1.msra.mxu0 0.0
  %545 = vmatprep.subr.mxu0 0.0
  %546 = vmatpush1.msra.mxu0 0.0
  %547 = vmatprep.subr.mxu0 0.0
  %548 = vmatpush1.msra.mxu0 0.0
  %549 = vmatprep.subr.mxu0 0.0
  %550 = vmatpush1.msra.mxu0 0.0
  %551 = vmatprep.subr.mxu0 0.0
  %552 = vmatpush1.msra.mxu0 0.0
  %553 = vmatprep.subr.mxu0 0.0
  %554 = vmatpush1.msra.mxu0 0.0
  %555 = vmatprep.subr.mxu0 0.0
  %556 = vmatpush1.msra.mxu0 0.0
  %557 = vmatprep.subr.mxu0 0.0
  %558 = vmatpush1.msra.mxu0 0.0
  %559 = vmatprep.subr.mxu0 0.0
  %560 = vmatpush1.msra.mxu0 0.0
  %561 = vmatprep.subr.mxu0 0.0
  %562 = vmatpush1.msra.mxu0 0.0
  %563 = vmatprep.subr.mxu0 0.0
  %564 = vmatpush1.msra.mxu0 0.0
  %565 = vmatprep.subr.mxu0 0.0
  %566 = vmatpush1.msra.mxu0 0.0
  %567 = vmatprep.subr.mxu0 0.0
  %568 = vmatpush1.msra.mxu0 0.0
  %569 = vmatprep.subr.mxu0 0.0
  %570 = vmatpush1.msra.mxu0 0.0
  %571 = vmatprep.subr.mxu0 0.0
  %572 = vmatpush1.msra.mxu0 0.0
  %573 = vmatprep.subr.mxu0 0.0
  %574 = vmatpush1.msra.mxu0 0.0
  %575 = vmatprep.subr.mxu0 0.0
  %576 = vmatpush1.msra.mxu0 0.0
  %577 = vmatprep.subr.mxu0 0.0
  %578 = vmatpush1.msra.mxu0 0.0
  %579 = vmatprep.subr.mxu0 0.0
  %580 = vmatpush1.msra.mxu0 0.0
  %581 = vmatprep.subr.mxu0 0.0
  %582 = vmatpush1.msra.mxu0 0.0
  %583 = vmatprep.subr.mxu0 0.0
  %584 = vmatpush1.msra.mxu0 0.0
  %585 = vmatprep.subr.mxu0 0.0
  %586 = vmatpush1.msra.mxu0 0.0
  %587 = vmatprep.subr.mxu0 0.0
  %588 = vmatpush1.msra.mxu0 0.0
  %589 = vmatprep.subr.mxu0 0.0
  %590 = vmatpush1.msra.mxu0 0.0
  %591 = vmatprep.subr.mxu0 0.0
  %592 = vmatpush1.msra.mxu0 0.0
  %593 = vmatprep.subr.mxu0 0.0
  %594 = vmatpush1.msra.mxu0 0.0
  %595 = vmatprep.subr.mxu0 0.0
  %596 = vmatpush1.msra.mxu0 0.0
  %597 = vmatprep.mubr.f32.mxu0 0.0
  %598 = vmatmul.mubr.f32.gmra.mrb[0].mxu0 %v397
  %v599 = vpop.f32.mrb[0].mxu0
  %v600 = vadd.f32 %v359, %v599
  %v601 = vpop.f32.mrb[0].mxu0
  %v602 = vadd.f32 %v359, %v601
  %603 = vmatprep.mubr.f32.mxu0 0.0
  %604 = vmatmul.mubr.f32.gmra.mrb[0].mxu0 %v400
  %v605 = vpop.f32.mrb[0].mxu0
  %v606 = vadd.f32 %v364, %v605
  %v607 = vpop.f32.mrb[0].mxu0
  %v608 = vadd.f32 %v364, %v607
  %609 = vmatprep.mubr.f32.mxu0 0.0
  %610 = vmatmul.mubr.f32.gmra.mrb[0].mxu0 %v403
  %v611 = vpop.f32.mrb[0].mxu0
  %v612 = vadd.f32 %v369, %v611
  %v613 = vpop.f32.mrb[0].mxu0
  %v614 = vadd.f32 %v369, %v613
  %615 = vmatprep.mubr.f32.mxu0 0.0
  %616 = vmatmul.mubr.f32.gmra.mrb[0].mxu0 %v406
  %v617 = vpop.f32.mrb[0].mxu0
  %v618 = vadd.f32 %v374, %v617
  %v619 = vpop.f32.mrb[0].mxu0
  %v620 = vadd.f32 %v374, %v619
  %621 = vmatprep.mubr.f32.mxu0 0.0
  %622 = vmatmul.mubr.f32.gmra.mrb[0].mxu0 %v409
  %v623 = vpop.f32.mrb[0].mxu0
  %v624 = vadd.f32 %v379, %v623
  %v625 = vpop.f32.mrb[0].mxu0
  %v626 = vadd.f32 %v379, %v625
  %627 = vmatprep.mubr.f32.mxu0 0.0
  %628 = vmatmul.mubr.f32.gmra.mrb[0].mxu0 %v412
  %v629 = vpop.f32.mrb[0].mxu0
  %v630 = vadd.f32 %v384, %v629
  %v631 = vpop.f32.mrb[0].mxu0
  %v632 = vadd.f32 %v384, %v631
  %633 = vmatprep.mubr.f32.mxu0 0.0
  %634 = vmatmul.mubr.f32.gmra.mrb[0].mxu0 %v415
  %v635 = vpop.f32.mrb[0].mxu0
  %v636 = vadd.f32 %v389, %v635
  %v637 = vpop.f32.mrb[0].mxu0
  %v638 = vadd.f32 %v389, %v637
  %639 = vmatprep.mubr.f32.mxu0 0.0
  %640 = vmatmul.mubr.f32.gmra.mrb[0].mxu0 %v418
  %v641 = vpop.f32.mrb[0].mxu0
  %v642 = vadd.f32 %v394, %v641
  %v643 = vpop.f32.mrb[0].mxu0
  %v644 = vadd.f32 %v394, %v643
  %645 = vdwg.mxu0
  %v646 = vxor.u32 %v487, 2147483648
  %v647 = vxor.u32 %v489, 2147483648
  %v648 = vxor.u32 %v600, 2147483648
  %v649 = vxor.u32 %v602, 2147483648
  %v650 = vxor.u32 %v493, 2147483648
  %v651 = vxor.u32 %v495, 2147483648
  %v652 = vxor.u32 %v606, 2147483648
  %v653 = vxor.u32 %v608, 2147483648
  %v654 = vxor.u32 %v499, 2147483648
  %v655 = vxor.u32 %v501, 2147483648
  %v656 = vxor.u32 %v612, 2147483648
  %v657 = vxor.u32 %v614, 2147483648
  %v658 = vxor.u32 %v505, 2147483648
  %v659 = vxor.u32 %v507, 2147483648
  %v660 = vxor.u32 %v618, 2147483648
  %v661 = vxor.u32 %v620, 2147483648
  %v662 = vxor.u32 %v511, 2147483648
  %v663 = vxor.u32 %v513, 2147483648
  %v664 = vxor.u32 %v624, 2147483648
  %v665 = vxor.u32 %v626, 2147483648
  %v666 = vxor.u32 %v517, 2147483648
  %v667 = vxor.u32 %v519, 2147483648
  %v668 = vxor.u32 %v630, 2147483648
  %v669 = vxor.u32 %v632, 2147483648
  %v670 = vxor.u32 %v523, 2147483648
  %v671 = vxor.u32 %v525, 2147483648
  %v672 = vxor.u32 %v636, 2147483648
  %v673 = vxor.u32 %v638, 2147483648
  %v674 = vxor.u32 %v529, 2147483648
  %v675 = vxor.u32 %v531, 2147483648
  %v676 = vxor.u32 %v642, 2147483648
  %v677 = vxor.u32 %v644, 2147483648
  %v678 = vmul.f32 %v646, 1.442695
  %v679 = vpow.pop %v678
  %v680 = vmul.f32 %v647, 1.442695
  %v681 = vpow.pop %v680
  %v682 = vmul.f32 %v648, 1.442695
  %v683 = vpow.pop %v682
  %v684 = vmul.f32 %v649, 1.442695
  %v685 = vpow.pop %v684
  %v686 = vmul.f32 %v650, 1.442695
  %v687 = vpow.pop %v686
  %v688 = vmul.f32 %v651, 1.442695
  %v689 = vpow.pop %v688
  %v690 = vmul.f32 %v652, 1.442695
  %v691 = vpow.pop %v690
  %v692 = vmul.f32 %v653, 1.442695
  %v693 = vpow.pop %v692
  %v694 = vmul.f32 %v654, 1.442695
  %v695 = vpow.pop %v694
  %v696 = vmul.f32 %v655, 1.442695
  %v697 = vpow.pop %v696
  %v698 = vmul.f32 %v656, 1.442695
  %v699 = vpow.pop %v698
  %v700 = vmul.f32 %v657, 1.442695
  %v701 = vpow.pop %v700
  %v702 = vmul.f32 %v658, 1.442695
  %v703 = vpow.pop %v702
  %v704 = vmul.f32 %v659, 1.442695
  %v705 = vpow.pop %v704
  %v706 = vmul.f32 %v660, 1.442695
  %v707 = vpow.pop %v706
  %v708 = vmul.f32 %v661, 1.442695
  %v709 = vpow.pop %v708
  %v710 = vmul.f32 %v662, 1.442695
  %v711 = vpow.pop %v710
  %v712 = vmul.f32 %v663, 1.442695
  %v713 = vpow.pop %v712
  %v714 = vmul.f32 %v664, 1.442695
  %v715 = vpow.pop %v714
  %v716 = vmul.f32 %v665, 1.442695
  %v717 = vpow.pop %v716
  %v718 = vmul.f32 %v666, 1.442695
  %v719 = vpow.pop %v718
  %v720 = vmul.f32 %v667, 1.442695
  %v721 = vpow.pop %v720
  %v722 = vmul.f32 %v668, 1.442695
  %v723 = vpow.pop %v722
  %v724 = vmul.f32 %v669, 1.442695
  %v725 = vpow.pop %v724
  %v726 = vmul.f32 %v670, 1.442695
  %v727 = vpow.pop %v726
  %v728 = vmul.f32 %v671, 1.442695
  %v729 = vpow.pop %v728
  %v730 = vmul.f32 %v672, 1.442695
  %v731 = vpow.pop %v730
  %v732 = vmul.f32 %v673, 1.442695
  %v733 = vpow.pop %v732
  %v734 = vmul.f32 %v674, 1.442695
  %v735 = vpow.pop %v734
  %v736 = vmul.f32 %v675, 1.442695
  %v737 = vpow.pop %v736
  %v738 = vmul.f32 %v676, 1.442695
  %v739 = vpow.pop %v738
  %v740 = vmul.f32 %v677, 1.442695
  %v741 = vpow.pop %v740
  %v742 = vadd.f32 %v679, 1.0
  %v743 = vadd.f32 %v681, 1.0
  %v744 = vadd.f32 %v683, 1.0
  %v745 = vadd.f32 %v685, 1.0
  %v746 = vadd.f32 %v687, 1.0
  %v747 = vadd.f32 %v689, 1.0
  %v748 = vadd.f32 %v691, 1.0
  %v749 = vadd.f32 %v693, 1.0
  %v750 = vadd.f32 %v695, 1.0
  %v751 = vadd.f32 %v697, 1.0
  %v752 = vadd.f32 %v699, 1.0
  %v753 = vadd.f32 %v701, 1.0
  %v754 = vadd.f32 %v703, 1.0
  %v755 = vadd.f32 %v705, 1.0
  %v756 = vadd.f32 %v707, 1.0
  %v757 = vadd.f32 %v709, 1.0
  %v758 = vadd.f32 %v711, 1.0
  %v759 = vadd.f32 %v713, 1.0
  %v760 = vadd.f32 %v715, 1.0
  %v761 = vadd.f32 %v717, 1.0
  %v762 = vadd.f32 %v719, 1.0
  %v763 = vadd.f32 %v721, 1.0
  %v764 = vadd.f32 %v723, 1.0
  %v765 = vadd.f32 %v725, 1.0
  %v766 = vadd.f32 %v727, 1.0
  %v767 = vadd.f32 %v729, 1.0
  %v768 = vadd.f32 %v731, 1.0
  %v769 = vadd.f32 %v733, 1.0
  %v770 = vadd.f32 %v735, 1.0
  %v771 = vadd.f32 %v737, 1.0
  %v772 = vadd.f32 %v739, 1.0
  %v773 = vadd.f32 %v741, 1.0
  %v774 = vrcp.pop %v742
  %v775 = vmul.f32 1.0, %v774
  %v776 = vrcp.pop %v743
  %v777 = vmul.f32 1.0, %v776
  %v778 = vrcp.pop %v744
  %v779 = vmul.f32 1.0, %v778
  %v780 = vrcp.pop %v745
  %v781 = vmul.f32 1.0, %v780
  %v782 = vrcp.pop %v746
  %v783 = vmul.f32 1.0, %v782
  %v784 = vrcp.pop %v747
  %v785 = vmul.f32 1.0, %v784
  %v786 = vrcp.pop %v748
  %v787 = vmul.f32 1.0, %v786
  %v788 = vrcp.pop %v749
  %v789 = vmul.f32 1.0, %v788
  %v790 = vrcp.pop %v750
  %v791 = vmul.f32 1.0, %v790
  %v792 = vrcp.pop %v751
  %v793 = vmul.f32 1.0, %v792
  %v794 = vrcp.pop %v752
  %v795 = vmul.f32 1.0, %v794
  %v796 = vrcp.pop %v753
  %v797 = vmul.f32 1.0, %v796
  %v798 = vrcp.pop %v754
  %v799 = vmul.f32 1.0, %v798
  %v800 = vrcp.pop %v755
  %v801 = vmul.f32 1.0, %v800
  %v802 = vrcp.pop %v756
  %v803 = vmul.f32 1.0, %v802
  %v804 = vrcp.pop %v757
  %v805 = vmul.f32 1.0, %v804
  %v806 = vrcp.pop %v758
  %v807 = vmul.f32 1.0, %v806
  %v808 = vrcp.pop %v759
  %v809 = vmul.f32 1.0, %v808
  %v810 = vrcp.pop %v760
  %v811 = vmul.f32 1.0, %v810
  %v812 = vrcp.pop %v761
  %v813 = vmul.f32 1.0, %v812
  %v814 = vrcp.pop %v762
  %v815 = vmul.f32 1.0, %v814
  %v816 = vrcp.pop %v763
  %v817 = vmul.f32 1.0, %v816
  %v818 = vrcp.pop %v764
  %v819 = vmul.f32 1.0, %v818
  %v820 = vrcp.pop %v765
  %v821 = vmul.f32 1.0, %v820
  %v822 = vrcp.pop %v766
  %v823 = vmul.f32 1.0, %v822
  %v824 = vrcp.pop %v767
  %v825 = vmul.f32 1.0, %v824
  %v826 = vrcp.pop %v768
  %v827 = vmul.f32 1.0, %v826
  %v828 = vrcp.pop %v769
  %v829 = vmul.f32 1.0, %v828
  %v830 = vrcp.pop %v770
  %v831 = vmul.f32 1.0, %v830
  %v832 = vrcp.pop %v771
  %v833 = vmul.f32 1.0, %v832
  %v834 = vrcp.pop %v772
  %v835 = vmul.f32 1.0, %v834
  %v836 = vrcp.pop %v773
  %v837 = vmul.f32 1.0, %v836
  %v838 = vmul.f32 %v487, %v775
  %v839 = vmul.f32 %v489, %v777
  %v840 = vmul.f32 %v600, %v779
  %v841 = vmul.f32 %v602, %v781
  %v842 = vmul.f32 %v493, %v783
  %v843 = vmul.f32 %v495, %v785
  %v844 = vmul.f32 %v606, %v787
  %v845 = vmul.f32 %v608, %v789
  %v846 = vmul.f32 %v499, %v791
  %v847 = vmul.f32 %v501, %v793
  %v848 = vmul.f32 %v612, %v795
  %v849 = vmul.f32 %v614, %v797
  %v850 = vmul.f32 %v505, %v799
  %v851 = vmul.f32 %v507, %v801
  %v852 = vmul.f32 %v618, %v803
  %v853 = vmul.f32 %v620, %v805
  %v854 = vmul.f32 %v511, %v807
  %v855 = vmul.f32 %v513, %v809
  %v856 = vmul.f32 %v624, %v811
  %v857 = vmul.f32 %v626, %v813
  %v858 = vmul.f32 %v517, %v815
  %v859 = vmul.f32 %v519, %v817
  %v860 = vmul.f32 %v630, %v819
  %v861 = vmul.f32 %v632, %v821
  %v862 = vmul.f32 %v523, %v823
  %v863 = vmul.f32 %v525, %v825
  %v864 = vmul.f32 %v636, %v827
  %v865 = vmul.f32 %v638, %v829
  %v866 = vmul.f32 %v529, %v831
  %v867 = vmul.f32 %v531, %v833
  %v868 = vmul.f32 %v642, %v835
  %v869 = vmul.f32 %v644, %v837
  %v870 = vadd.f32 %v838, %v839
  %871 = vadd.xlane.f32.xlu0 %v870
  %v872 = vpop.xlane.xlu0 %871
  %v873 = vadd.f32 %v842, %v843
  %874 = vadd.xlane.f32.xlu0 %v873
  %v875 = vpop.xlane.xlu0 %874
  %v876 = vadd.f32 %v846, %v847
  %877 = vadd.xlane.f32.xlu0 %v876
  %v878 = vpop.xlane.xlu0 %877
  %v879 = vadd.f32 %v850, %v851
  %880 = vadd.xlane.f32.xlu0 %v879
  %v881 = vpop.xlane.xlu0 %880
  %v882 = vadd.f32 %v854, %v855
  %883 = vadd.xlane.f32.xlu0 %v882
  %v884 = vpop.xlane.xlu0 %883
  %v885 = vadd.f32 %v858, %v859
  %886 = vadd.xlane.f32.xlu0 %v885
  %v887 = vpop.xlane.xlu0 %886
  %v888 = vadd.f32 %v862, %v863
  %889 = vadd.xlane.f32.xlu0 %v888
  %v890 = vpop.xlane.xlu0 %889
  %v891 = vadd.f32 %v866, %v867
  %892 = vadd.xlane.f32.xlu0 %v891
  %v893 = vpop.xlane.xlu0 %892
  %v894 = vmul.f32 %v872, 0.00390625
  %v895 = vmul.f32 %v875, 0.00390625
  %v896 = vmul.f32 %v878, 0.00390625
  %v897 = vmul.f32 %v881, 0.00390625
  %v898 = vmul.f32 %v884, 0.00390625
  %v899 = vmul.f32 %v887, 0.00390625
  %v900 = vmul.f32 %v890, 0.00390625
  %v901 = vmul.f32 %v893, 0.00390625
  %vm902 = vcmask 7168
  %903 = vst.msk [vmem:[%s4] sm:$0xff] %vm902, %v894
  %904 = vst.msk [vmem:[%s4 + $0x8] sm:$0xff] %vm902, %v895
  %905 = vst.msk [vmem:[%s4 + $0x10] sm:$0xff] %vm902, %v896
  %906 = vst.msk [vmem:[%s4 + $0x18] sm:$0xff] %vm902, %v897
  %907 = vst.msk [vmem:[%s4 + $0x20] sm:$0xff] %vm902, %v898
  %908 = vst.msk [vmem:[%s4 + $0x28] sm:$0xff] %vm902, %v899
  %909 = vst.msk [vmem:[%s4 + $0x30] sm:$0xff] %vm902, %v900
  %910 = vst.msk [vmem:[%s4 + $0x38] sm:$0xff] %vm902, %v901
  %v911 = vadd.f32 %v840, %v841
  %912 = vadd.xlane.f32.xlu0 %v911
  %v913 = vpop.xlane.xlu0 %912
  %v914 = vadd.f32 %v844, %v845
  %915 = vadd.xlane.f32.xlu0 %v914
  %v916 = vpop.xlane.xlu0 %915
  %v917 = vadd.f32 %v848, %v849
  %918 = vadd.xlane.f32.xlu0 %v917
  %v919 = vpop.xlane.xlu0 %918
  %v920 = vadd.f32 %v852, %v853
  %921 = vadd.xlane.f32.xlu0 %v920
  %v922 = vpop.xlane.xlu0 %921
  %v923 = vadd.f32 %v856, %v857
  %924 = vadd.xlane.f32.xlu0 %v923
  %v925 = vpop.xlane.xlu0 %924
  %v926 = vadd.f32 %v860, %v861
  %927 = vadd.xlane.f32.xlu0 %v926
  %v928 = vpop.xlane.xlu0 %927
  %v929 = vadd.f32 %v864, %v865
  %930 = vadd.xlane.f32.xlu0 %v929
  %v931 = vpop.xlane.xlu0 %930
  %v932 = vadd.f32 %v868, %v869
  %933 = vadd.xlane.f32.xlu0 %v932
  %v934 = vpop.xlane.xlu0 %933
  %v935 = vmul.f32 %v913, 0.00390625
  %v936 = vmul.f32 %v916, 0.00390625
  %v937 = vmul.f32 %v919, 0.00390625
  %v938 = vmul.f32 %v922, 0.00390625
  %v939 = vmul.f32 %v925, 0.00390625
  %v940 = vmul.f32 %v928, 0.00390625
  %v941 = vmul.f32 %v931, 0.00390625
  %v942 = vmul.f32 %v934, 0.00390625
  %vm943 = vcmask 15368
  %944 = vst.msk [vmem:[%s4] sm:$0xff] %vm943, %v935
  %945 = vst.msk [vmem:[%s4 + $0x8] sm:$0xff] %vm943, %v936
  %946 = vst.msk [vmem:[%s4 + $0x10] sm:$0xff] %vm943, %v937
  %947 = vst.msk [vmem:[%s4 + $0x18] sm:$0xff] %vm943, %v938
  %948 = vst.msk [vmem:[%s4 + $0x20] sm:$0xff] %vm943, %v939
  %949 = vst.msk [vmem:[%s4 + $0x28] sm:$0xff] %vm943, %v940
  %950 = vst.msk [vmem:[%s4 + $0x30] sm:$0xff] %vm943, %v941
  %951 = vst.msk [vmem:[%s4 + $0x38] sm:$0xff] %vm943, %v942
  // Predicated region
  $region18: #{encoder_forward.1} parent=0 // pred_check
    _
  $region19: #{encoder_forward.1} parent=0 // pred_check_branch
    %953 = sbr.rel (0) target = $region21
  $region20: #{encoder_forward.1} parent=0 // pred_region
    _
  $region21: #{encoder_forward.1} parent=0 // pred_fallthru
    _
  // Predicated region
  $region22: #{encoder_forward.1} parent=0 // pred_check
    _
  $region23: #{encoder_forward.1} parent=0 // pred_check_branch
    %955 = sbr.rel (0) target = $region25
  $region24: #{encoder_forward.1} parent=0 // pred_region
    _
  $region25: #{encoder_forward.1} parent=0 // pred_fallthru
    _

</llo_original>
